<compile_context>
chip_gen: v7x
topology: tpu7x:2x2x1
jax: 0.10.0
libtpu: 0.0.40
codegen_flags: <defaults>
</compile_context>

<pallas_src>
import math

import jax
import jax.numpy as jnp
from jax.experimental import pallas as pl
from jax.experimental.pallas import tpu as pltpu

LANE = 128      # lane width: feature / contraction dims are padded to this
SUBLANE = 8     # sublane count: batch dim is padded to a multiple of this


def _round_up(x, m):
    return (x + m - 1) // m * m


def _silu(h):
    # Exact SiLU: sigmoid via tanh identity -> a single EUP push per vreg,
    # no VPU divide, f32-exact (unlike exp + approximate reciprocal).
    return h * (0.5 * (jnp.tanh(0.5 * h) + 1.0))


# ---------------------------------------------------------------------------
# Pallas kernel: one-hot MXU gather + Linear -> SiLU -> Linear -> SiLU.
# ---------------------------------------------------------------------------
def _diffusion_embedding_kernel(step_ref, table_ref, w_ref, b_ref, o_ref):
    # step_ref  : VMEM int32 [B_pad, 1]        (padded rows hold -1)
    # table_ref : VMEM f32   [T_pad, Dpad]     lane-padded sinusoidal table
    # w_ref     : VMEM f32   [2, Dpad, Dpad]   projection1 / projection2, [in, out]
    # b_ref     : VMEM f32   [2, Dpad]         bias1 / bias2
    # o_ref     : VMEM f32   [B_pad, Dpad]
    b_pad = o_ref.shape[0]
    t_pad = table_ref.shape[0]

    # One-hot MXU gather: onehot[i, t] = (t == step[i]).  Padded rows use
    # step = -1 -> all-zero row -> x = 0 (no garbage gather of table row 0).
    t_iota = jax.lax.broadcasted_iota(jnp.int32, (b_pad, t_pad), 1)
    onehot = (t_iota == step_ref[...]).astype(jnp.float32)        # [B_pad, T_pad]
    x = jnp.dot(onehot, table_ref[...],
                preferred_element_type=jnp.float32)               # [B_pad, Dpad]

    # projection1 + SiLU
    h = jnp.dot(x, w_ref[0], preferred_element_type=jnp.float32)
    h = _silu(h + b_ref[pl.ds(0, 1), :])

    # projection2 + SiLU
    y = jnp.dot(h, w_ref[1], preferred_element_type=jnp.float32)
    y = _silu(y + b_ref[pl.ds(1, 1), :])

    o_ref[...] = y                                                # lane-dense store


# ---------------------------------------------------------------------------
# One-time parameter packing (module init) — NOT in the per-call path.
# ---------------------------------------------------------------------------
def prepare_params(table, w1, b1, w2, b2):
    """Pad/pack the loop-invariant operands once.

    table: [T, E]; w1: [E, P]; b1: [1, P] or [P]; w2: [P, P]; b2: [1, P] or [P].
    """
    T, E = table.shape
    P = w2.shape[1]
    T_pad = _round_up(T, LANE)                      # lane-dense one-hot contraction dim
    Dpad = max(_round_up(E, LANE), _round_up(P, LANE))

    table_p = jnp.zeros((T_pad, Dpad), jnp.float32).at[:T, :E].set(table)
    w_p = (jnp.zeros((2, Dpad, Dpad), jnp.float32)
           .at[0, :E, :P].set(w1)
           .at[1, :P, :P].set(w2))
    b_p = (jnp.zeros((2, Dpad), jnp.float32)
           .at[0, :P].set(jnp.reshape(b1, (-1,)))
           .at[1, :P].set(jnp.reshape(b2, (-1,))))

    return {"table": table_p, "w": w_p, "b": b_p,
            "num_steps": T, "embedding_dim": E, "projection_dim": P}


# ---------------------------------------------------------------------------
# Per-call forward.
# ---------------------------------------------------------------------------
def diffusion_embedding_forward(params, diffusion_step):
    """diffusion_step: int32 [B] -> [B, P] f32."""
    B = diffusion_step.shape[0]
    B_pad = _round_up(B, SUBLANE)
    Dpad = params["table"].shape[1]
    P = params["projection_dim"]

    # Step vector as a VMEM int32 column; padded rows are -1 (never matched).
    steps_col = (jnp.full((B_pad, 1), -1, jnp.int32)
                 .at[:B, 0].set(diffusion_step.astype(jnp.int32)))

    vmem = pl.BlockSpec(memory_space=pltpu.MemorySpace.VMEM)
    out_p = pl.pallas_call(
        _diffusion_embedding_kernel,
        out_shape=jax.ShapeDtypeStruct((B_pad, Dpad), jnp.float32),
        in_specs=[vmem, vmem, vmem, vmem],
        out_specs=vmem,
    )(steps_col, params["table"], params["w"], params["b"])

    # Keep the padded lane-dense slab if the consumer is another Pallas kernel;
    # slice only at the host-visible boundary (here, for the reference check).
    return out_p[:B, :P]


def precompute_all_step_embeddings(params):
    """Sampling-loop use: one kernel call for all timesteps, cache [T, P]."""
    all_steps = jnp.arange(params["num_steps"], dtype=jnp.int32)
    return diffusion_embedding_forward(params, all_steps)


# ---------------------------------------------------------------------------
# Parameter / buffer construction (deterministic, matches the PyTorch module).
# ---------------------------------------------------------------------------
def build_embedding_table(num_steps, half_dim):
    steps = jnp.arange(num_steps, dtype=jnp.float32)[:, None]            # [T, 1]
    frequencies = 10.0 ** (
        jnp.arange(half_dim, dtype=jnp.float32) / (half_dim - 1) * 4.0
    )[None, :]                                                           # [1, D/2]
    table = steps * frequencies                                          # [T, D/2]
    return jnp.concatenate([jnp.sin(table), jnp.cos(table)], axis=1)     # [T, D]


def init_linear(key, in_dim, out_dim):
    # nn.Linear default init: U(-1/sqrt(in), 1/sqrt(in)) for weight and bias.
    kw, kb = jax.random.split(key)
    bound = 1.0 / math.sqrt(in_dim)
    # Stored pre-transposed: [in, out]  (PyTorch weight is [out, in]).
    w = jax.random.uniform(kw, (in_dim, out_dim), jnp.float32, -bound, bound)
    b = jax.random.uniform(kb, (1, out_dim), jnp.float32, -bound, bound)
    return w, b


def reference_forward(table, diffusion_step, w1, b1, w2, b2):
    x = jnp.take(table, diffusion_step, axis=0)
    h = x @ w1 + b1
    h = h * jax.nn.sigmoid(h)
    y = h @ w2 + b2
    return y * jax.nn.sigmoid(y)


if __name__ == "__main__":
    num_steps = 50
    embedding_dim = 32
    projection_dim = 32
    batch = 8

    key = jax.random.PRNGKey(0)
    k_step, k_p1, k_p2 = jax.random.split(key, 3)

    table = build_embedding_table(num_steps, embedding_dim // 2)   # [50, 32]
    w1, b1 = init_linear(k_p1, embedding_dim, projection_dim)
    w2, b2 = init_linear(k_p2, projection_dim, projection_dim)

    # Pad / pack once (module init), not per call.
    params = prepare_params(table, w1, b1, w2, b2)

    diffusion_step = jax.random.randint(k_step, (batch,), 0, num_steps, jnp.int32)

    out = diffusion_embedding_forward(params, diffusion_step)
    out = jax.block_until_ready(out)

    ref = reference_forward(table, diffusion_step, w1, b1, w2, b2)
    assert out.shape == (batch, projection_dim)
    # SiLU is now exact; remaining tolerance only covers the default-precision
    # MXU matmul path vs. the XLA reference matmul (structural bugs would be
    # orders of magnitude larger).
    assert jnp.allclose(out, ref, atol=1e-3, rtol=1e-3), "mismatch vs JAX reference"

    # Sampling-loop convenience: one call for all timesteps, then a trivial take.
    cache = jax.block_until_ready(precompute_all_step_embeddings(params))
    assert cache.shape == (num_steps, projection_dim)
    assert jnp.allclose(jnp.take(cache, diffusion_step, axis=0), out,
                        atol=1e-3, rtol=1e-3), "cached-table mismatch"

    print("KERNEL_OK")
</pallas_src>

<mosaic_0001>
module attributes {stable_mosaic.version = 11 : i64} {
  func.func @_diffusion_embedding_kernel(%arg0: memref<8x1xi32, #tpu.memory_space<vmem>>, %arg1: memref<128x128xf32, #tpu.memory_space<vmem>>, %arg2: memref<2x128x128xf32, #tpu.memory_space<vmem>>, %arg3: memref<2x128xf32, #tpu.memory_space<vmem>>, %arg4: memref<8x128xf32, #tpu.memory_space<vmem>>) attributes {dimension_semantics = [], scalar_prefetch = 0 : i64, scratch_operands = 0 : i64, tpu.core_type = #tpu.core_type<tc>} {
    %0 = tpu.iota {dimensions = array<i32: 1>} : vector<8x128xi32>
    %c0 = arith.constant 0 : index
    %c0_0 = arith.constant 0 : index
    %1 = vector.load %arg0[%c0, %c0_0] : memref<8x1xi32, #tpu.memory_space<vmem>>, vector<8x1xi32>
    %2 = vector.broadcast %1 : vector<8x1xi32> to vector<8x128xi32>
    %3 = arith.cmpi eq, %0, %2 : vector<8x128xi32>
    %4 = arith.extui %3 : vector<8x128xi1> to vector<8x128xi32>
    %5 = arith.sitofp %4 : vector<8x128xi32> to vector<8x128xf32>
    %c0_1 = arith.constant 0 : index
    %c0_2 = arith.constant 0 : index
    %6 = vector.load %arg1[%c0_1, %c0_2] : memref<128x128xf32, #tpu.memory_space<vmem>>, vector<128x128xf32>
    %cst = arith.constant dense<0.000000e+00> : vector<8x128xf32>
    %7 = tpu.matmul %5, %6, %cst {dimension_numbers = #tpu.dot_dimension_numbers<[1], [0], [0], [1], [0, 0, 1, 1], [], []>} : vector<8x128xf32>, vector<128x128xf32>, vector<8x128xf32> -> vector<8x128xf32>
    %c0_3 = arith.constant 0 : index
    %c0_4 = arith.constant 0 : index
    %c0_5 = arith.constant 0 : index
    %8 = vector.load %arg2[%c0_3, %c0_4, %c0_5] : memref<2x128x128xf32, #tpu.memory_space<vmem>>, vector<1x128x128xf32>
    %9 = vector.shape_cast %8 : vector<1x128x128xf32> to vector<128x128xf32>
    %cst_6 = arith.constant dense<0.000000e+00> : vector<8x128xf32>
    %10 = tpu.matmul %7, %9, %cst_6 {dimension_numbers = #tpu.dot_dimension_numbers<[1], [0], [0], [1], [0, 0, 1, 1], [], []>} : vector<8x128xf32>, vector<128x128xf32>, vector<8x128xf32> -> vector<8x128xf32>
    %c0_7 = arith.constant 0 : index
    %c0_8 = arith.constant 0 : index
    %11 = vector.load %arg3[%c0_7, %c0_8] : memref<2x128xf32, #tpu.memory_space<vmem>>, vector<1x128xf32>
    %12 = vector.broadcast %11 : vector<1x128xf32> to vector<8x128xf32>
    %13 = arith.addf %10, %12 : vector<8x128xf32>
    %cst_9 = arith.constant 5.000000e-01 : f32
    %14 = vector.broadcast %cst_9 : f32 to vector<8x128xf32>
    %15 = arith.mulf %14, %13 : vector<8x128xf32>
    %16 = math.tanh %15 : vector<8x128xf32>
    %cst_10 = arith.constant 1.000000e+00 : f32
    %17 = vector.broadcast %cst_10 : f32 to vector<8x128xf32>
    %18 = arith.addf %16, %17 : vector<8x128xf32>
    %cst_11 = arith.constant 5.000000e-01 : f32
    %19 = vector.broadcast %cst_11 : f32 to vector<8x128xf32>
    %20 = arith.mulf %19, %18 : vector<8x128xf32>
    %21 = arith.mulf %13, %20 : vector<8x128xf32>
    %c1 = arith.constant 1 : index
    %c0_12 = arith.constant 0 : index
    %c0_13 = arith.constant 0 : index
    %22 = vector.load %arg2[%c1, %c0_12, %c0_13] : memref<2x128x128xf32, #tpu.memory_space<vmem>>, vector<1x128x128xf32>
    %23 = vector.shape_cast %22 : vector<1x128x128xf32> to vector<128x128xf32>
    %cst_14 = arith.constant dense<0.000000e+00> : vector<8x128xf32>
    %24 = tpu.matmul %21, %23, %cst_14 {dimension_numbers = #tpu.dot_dimension_numbers<[1], [0], [0], [1], [0, 0, 1, 1], [], []>} : vector<8x128xf32>, vector<128x128xf32>, vector<8x128xf32> -> vector<8x128xf32>
    %c1_15 = arith.constant 1 : index
    %c0_16 = arith.constant 0 : index
    %25 = vector.load %arg3[%c1_15, %c0_16] : memref<2x128xf32, #tpu.memory_space<vmem>>, vector<1x128xf32>
    %26 = vector.broadcast %25 : vector<1x128xf32> to vector<8x128xf32>
    %27 = arith.addf %24, %26 : vector<8x128xf32>
    %cst_17 = arith.constant 5.000000e-01 : f32
    %28 = vector.broadcast %cst_17 : f32 to vector<8x128xf32>
    %29 = arith.mulf %28, %27 : vector<8x128xf32>
    %30 = math.tanh %29 : vector<8x128xf32>
    %cst_18 = arith.constant 1.000000e+00 : f32
    %31 = vector.broadcast %cst_18 : f32 to vector<8x128xf32>
    %32 = arith.addf %30, %31 : vector<8x128xf32>
    %cst_19 = arith.constant 5.000000e-01 : f32
    %33 = vector.broadcast %cst_19 : f32 to vector<8x128xf32>
    %34 = arith.mulf %33, %32 : vector<8x128xf32>
    %35 = arith.mulf %27, %34 : vector<8x128xf32>
    %c0_20 = arith.constant 0 : index
    %c0_21 = arith.constant 0 : index
    %36 = vector.load %arg4[%c0_20, %c0_21] : memref<8x128xf32, #tpu.memory_space<vmem>>, vector<8x128xf32>
    tpu.vector_store %arg4[%c0_20, %c0_21], %35 {strides = array<i32>} : memref<8x128xf32, #tpu.memory_space<vmem>>, vector<8x128xf32>,
    return
  }
}

</mosaic_0001>

<llo_original>
// kernel: tpu_custom_call.1
$region0: #{tpu_custom_call.1}
  #allocation0 [shape = 'u32[]', space=smem, size = 0x4, offset = 0x4, fixed_abs, tag = 'smem constant byte address 0x4 - core index']
  #allocation1 [shape = 'u32[144,128]{1,0:T(1,128)}', space=vmem, size = 0x12000, scoped, tag = 'internal scratch']
  %s0 = inlined_call_operand.vmem [shape: s32[8,1], index: 0, kind: input, shape index: {}]
  %s1 = inlined_call_operand.hbm [shape: f32[128,128], index: 1, kind: input, shape index: {}]
  %s2 = inlined_call_operand.hbm [shape: f32[2,128,128], index: 2, kind: input, shape index: {}]
  %s3 = inlined_call_operand.vmem [shape: f32[2,128], index: 3, kind: input, shape index: {}]
  %s4 = inlined_call_operand.hbm [shape: f32[8,128], index: 4, kind: output, shape index: {}]
  %s5 = sld [smem:[#allocation0]]
  $region34: #{tpu_custom_call.1} parent=0
    _
  %s7 = ssub.s32 1, %s5
  %s8 = scalar_select 0, %s7, %s5
  $region1: #{tpu_custom_call.1} parent=0
    #allocation2 [shape = 'u8[65536]{0}', space=vmem, size = 0x10000, scoped, tag = 'input window, operand 1, single buffered']
    #allocation3 [shape = 's32[1]{0}', space=sflag, size = 0x4, scoped, tag = 'scoped memory for tpu_custom_call.1']
    #allocation4 [shape = 's32[1]{0}', space=sflag, size = 0x4, scoped, tag = 'scoped memory for tpu_custom_call.1']
    #allocation5 [shape = 'u8[131072]{0}', space=vmem, size = 0x20000, scoped, tag = 'input window, operand 2, single buffered']
    #allocation6 [shape = 's32[1]{0}', space=sflag, size = 0x4, scoped, tag = 'scoped memory for tpu_custom_call.1']
    #allocation7 [shape = 'u8[4096]{0}', space=vmem, size = 0x1000, scoped, tag = 'output window, operand 0, single buffered']
    %9 = vsyncpa [#allocation3], 0
    %10 = vsyncpa [#allocation6], 0
    %11 = vsyncpa [#allocation4], 0
    // Predicated region
    $region2: #{tpu_custom_call.1} parent=1 // pred_check
      _
    $region3: #{tpu_custom_call.1} parent=1 // pred_check_branch
      %13 = sbr.rel (0) target = $region5
    $region4: #{tpu_custom_call.1} parent=1 // pred_region
      _
    $region5: #{tpu_custom_call.1} parent=1 // pred_fallthru
      _
    // Predicated region
    $region6: #{tpu_custom_call.1} parent=1 // pred_check
      _
    $region7: #{tpu_custom_call.1} parent=1 // pred_check_branch
      %15 = sbr.rel (0) target = $region9
    $region8: #{tpu_custom_call.1} parent=1 // pred_region
      %s17 = ssub.s32 2048, 2048
      %18 = vsyncadd [#allocation3], %s17
      %s19 = sshll.u32 [#allocation2], 4
      %s20 = int_to_ptr.vmem [resolvable:$true] %s19
      %25 = dma.hbm_to_vmem [thread:$0]  %s1, 2048, %s20, [#allocation3], 128, 128, 8
    $region9: #{tpu_custom_call.1} parent=1 // pred_fallthru
      _
    // Predicated region
    $region10: #{tpu_custom_call.1} parent=1 // pred_check
      _
    $region11: #{tpu_custom_call.1} parent=1 // pred_check_branch
      %27 = sbr.rel (0) target = $region13
    $region12: #{tpu_custom_call.1} parent=1 // pred_region
      %s29 = ssub.s32 4096, 4096
      %30 = vsyncadd [#allocation6], %s29
      %s31 = sshll.u32 [#allocation5], 4
      %s32 = int_to_ptr.vmem [resolvable:$true] %s31
      %37 = dma.hbm_to_vmem [thread:$0]  %s2, 4096, %s32, [#allocation6], 128, 128, 8
    $region13: #{tpu_custom_call.1} parent=1 // pred_fallthru
      _
    // Predicated region
    $region14: #{tpu_custom_call.1} parent=1 // pred_check
      _
    $region15: #{tpu_custom_call.1} parent=1 // pred_check_branch
      %39 = sbr.rel (0) target = $region17
    $region16: #{tpu_custom_call.1} parent=1 // pred_region
      _
    $region17: #{tpu_custom_call.1} parent=1 // pred_fallthru
      _
    // Predicated region
    $region18: #{tpu_custom_call.1} parent=1 // pred_check
      _
    $region19: #{tpu_custom_call.1} parent=1 // pred_check_branch
      %41 = sbr.rel (0) target = $region21
    $region20: #{tpu_custom_call.1} parent=1 // pred_region
      %42 = dma.done [#allocation3], 2048
    $region21: #{tpu_custom_call.1} parent=1 // pred_fallthru
      _
    // Predicated region
    $region22: #{tpu_custom_call.1} parent=1 // pred_check
      _
    $region23: #{tpu_custom_call.1} parent=1 // pred_check_branch
      %44 = sbr.rel (0) target = $region25
    $region24: #{tpu_custom_call.1} parent=1 // pred_region
      %45 = dma.done [#allocation6], 4096
    $region25: #{tpu_custom_call.1} parent=1 // pred_fallthru
      _
    %v46 = vlaneseq
    %v47 = vand.u32 %v46, 127
    %v48 = vld [vmem:[%s0] sm:$0xff]
    %49 = vset.pattern.permute.xlu0 0
    %50 = vperm.xlu0 %49, %v48
    %v51 = vpop.permute.xlu0 %50
    %vm52 = vcmp.eq.s32.totalorder %v47, %v51
    %v53 = vsel %vm52, 1, 0
    %v54 = vcvt.s32.f32 %v53
    %v55 = vld [vmem:[#allocation2] sm:$0xff]
    %v56 = vld [vmem:[#allocation2 + $0x8] sm:$0xff]
    %v57 = vld [vmem:[#allocation2 + $0x10] sm:$0xff]
    %v58 = vld [vmem:[#allocation2 + $0x18] sm:$0xff]
    %v59 = vld [vmem:[#allocation2 + $0x20] sm:$0xff]
    %v60 = vld [vmem:[#allocation2 + $0x28] sm:$0xff]
    %v61 = vld [vmem:[#allocation2 + $0x30] sm:$0xff]
    %v62 = vld [vmem:[#allocation2 + $0x38] sm:$0xff]
    %v63 = vld [vmem:[#allocation2 + $0x40] sm:$0xff]
    %v64 = vld [vmem:[#allocation2 + $0x48] sm:$0xff]
    %v65 = vld [vmem:[#allocation2 + $0x50] sm:$0xff]
    %v66 = vld [vmem:[#allocation2 + $0x58] sm:$0xff]
    %v67 = vld [vmem:[#allocation2 + $0x60] sm:$0xff]
    %v68 = vld [vmem:[#allocation2 + $0x68] sm:$0xff]
    %v69 = vld [vmem:[#allocation2 + $0x70] sm:$0xff]
    %v70 = vld [vmem:[#allocation2 + $0x78] sm:$0xff]
    %71 = vmatprep.subr.mxu0 0.0
    %72 = vmatpush1.msra.mxu0 %v55
    %73 = vmatprep.subr.mxu0 0.0
    %74 = vmatpush1.msra.mxu0 %v56
    %75 = vmatprep.subr.mxu0 0.0
    %76 = vmatpush1.msra.mxu0 %v57
    %77 = vmatprep.subr.mxu0 0.0
    %78 = vmatpush1.msra.mxu0 %v58
    %79 = vmatprep.subr.mxu0 0.0
    %80 = vmatpush1.msra.mxu0 %v59
    %81 = vmatprep.subr.mxu0 0.0
    %82 = vmatpush1.msra.mxu0 %v60
    %83 = vmatprep.subr.mxu0 0.0
    %84 = vmatpush1.msra.mxu0 %v61
    %85 = vmatprep.subr.mxu0 0.0
    %86 = vmatpush1.msra.mxu0 %v62
    %87 = vmatprep.subr.mxu0 0.0
    %88 = vmatpush1.msra.mxu0 %v63
    %89 = vmatprep.subr.mxu0 0.0
    %90 = vmatpush1.msra.mxu0 %v64
    %91 = vmatprep.subr.mxu0 0.0
    %92 = vmatpush1.msra.mxu0 %v65
    %93 = vmatprep.subr.mxu0 0.0
    %94 = vmatpush1.msra.mxu0 %v66
    %95 = vmatprep.subr.mxu0 0.0
    %96 = vmatpush1.msra.mxu0 %v67
    %97 = vmatprep.subr.mxu0 0.0
    %98 = vmatpush1.msra.mxu0 %v68
    %99 = vmatprep.subr.mxu0 0.0
    %100 = vmatpush1.msra.mxu0 %v69
    %101 = vmatprep.subr.mxu0 0.0
    %102 = vmatpush1.msra.mxu0 %v70
    %103 = vmatprep.subr.mxu0 0.0
    %104 = vmatpush1.msra.mxu0 0.0
    %105 = vmatprep.subr.mxu0 0.0
    %106 = vmatpush1.msra.mxu0 0.0
    %107 = vmatprep.subr.mxu0 0.0
    %108 = vmatpush1.msra.mxu0 0.0
    %109 = vmatprep.subr.mxu0 0.0
    %110 = vmatpush1.msra.mxu0 0.0
    %111 = vmatprep.subr.mxu0 0.0
    %112 = vmatpush1.msra.mxu0 0.0
    %113 = vmatprep.subr.mxu0 0.0
    %114 = vmatpush1.msra.mxu0 0.0
    %115 = vmatprep.subr.mxu0 0.0
    %116 = vmatpush1.msra.mxu0 0.0
    %117 = vmatprep.subr.mxu0 0.0
    %118 = vmatpush1.msra.mxu0 0.0
    %119 = vmatprep.subr.mxu0 0.0
    %120 = vmatpush1.msra.mxu0 0.0
    %121 = vmatprep.subr.mxu0 0.0
    %122 = vmatpush1.msra.mxu0 0.0
    %123 = vmatprep.subr.mxu0 0.0
    %124 = vmatpush1.msra.mxu0 0.0
    %125 = vmatprep.subr.mxu0 0.0
    %126 = vmatpush1.msra.mxu0 0.0
    %127 = vmatprep.subr.mxu0 0.0
    %128 = vmatpush1.msra.mxu0 0.0
    %129 = vmatprep.subr.mxu0 0.0
    %130 = vmatpush1.msra.mxu0 0.0
    %131 = vmatprep.subr.mxu0 0.0
    %132 = vmatpush1.msra.mxu0 0.0
    %133 = vmatprep.subr.mxu0 0.0
    %134 = vmatpush1.msra.mxu0 0.0
    %135 = vmatprep.mubr.f32.mxu0 0.0
    %136 = vmatmul.mubr.f32.gmra.mrb[0].mxu0 %v54
    %v137 = vpop.f32.mrb[0].mxu0
    %v138 = vadd.f32 0.0, %v137
    %v139 = vpop.f32.mrb[0].mxu0
    %140 = vdwg.mxu0
    %v141 = vld [vmem:[#allocation5] sm:$0xff]
    %v142 = vld [vmem:[#allocation5 + $0x8] sm:$0xff]
    %v143 = vld [vmem:[#allocation5 + $0x10] sm:$0xff]
    %v144 = vld [vmem:[#allocation5 + $0x18] sm:$0xff]
    %v145 = vld [vmem:[#allocation5 + $0x20] sm:$0xff]
    %v146 = vld [vmem:[#allocation5 + $0x28] sm:$0xff]
    %v147 = vld [vmem:[#allocation5 + $0x30] sm:$0xff]
    %v148 = vld [vmem:[#allocation5 + $0x38] sm:$0xff]
    %v149 = vld [vmem:[#allocation5 + $0x40] sm:$0xff]
    %v150 = vld [vmem:[#allocation5 + $0x48] sm:$0xff]
    %v151 = vld [vmem:[#allocation5 + $0x50] sm:$0xff]
    %v152 = vld [vmem:[#allocation5 + $0x58] sm:$0xff]
    %v153 = vld [vmem:[#allocation5 + $0x60] sm:$0xff]
    %v154 = vld [vmem:[#allocation5 + $0x68] sm:$0xff]
    %v155 = vld [vmem:[#allocation5 + $0x70] sm:$0xff]
    %v156 = vld [vmem:[#allocation5 + $0x78] sm:$0xff]
    %v157 = vld [vmem:[%s3] sm:$0x1]
    %v158 = vlaneseq
    %v159 = vshrl.u32 %v158, 7
    %v160 = vsub.s32 0, %v159
    %v161 = vrot.slane %v157, %v160
    %162 = vmatprep.subr.mxu0 0.0
    %163 = vmatpush1.msra.mxu0 %v141
    %164 = vmatprep.subr.mxu0 0.0
    %165 = vmatpush1.msra.mxu0 %v142
    %166 = vmatprep.subr.mxu0 0.0
    %167 = vmatpush1.msra.mxu0 %v143
    %168 = vmatprep.subr.mxu0 0.0
    %169 = vmatpush1.msra.mxu0 %v144
    %170 = vmatprep.subr.mxu0 0.0
    %171 = vmatpush1.msra.mxu0 %v145
    %172 = vmatprep.subr.mxu0 0.0
    %173 = vmatpush1.msra.mxu0 %v146
    %174 = vmatprep.subr.mxu0 0.0
    %175 = vmatpush1.msra.mxu0 %v147
    %176 = vmatprep.subr.mxu0 0.0
    %177 = vmatpush1.msra.mxu0 %v148
    %178 = vmatprep.subr.mxu0 0.0
    %179 = vmatpush1.msra.mxu0 %v149
    %180 = vmatprep.subr.mxu0 0.0
    %181 = vmatpush1.msra.mxu0 %v150
    %182 = vmatprep.subr.mxu0 0.0
    %183 = vmatpush1.msra.mxu0 %v151
    %184 = vmatprep.subr.mxu0 0.0
    %185 = vmatpush1.msra.mxu0 %v152
    %186 = vmatprep.subr.mxu0 0.0
    %187 = vmatpush1.msra.mxu0 %v153
    %188 = vmatprep.subr.mxu0 0.0
    %189 = vmatpush1.msra.mxu0 %v154
    %190 = vmatprep.subr.mxu0 0.0
    %191 = vmatpush1.msra.mxu0 %v155
    %192 = vmatprep.subr.mxu0 0.0
    %193 = vmatpush1.msra.mxu0 %v156
    %194 = vmatprep.subr.mxu0 0.0
    %195 = vmatpush1.msra.mxu0 0.0
    %196 = vmatprep.subr.mxu0 0.0
    %197 = vmatpush1.msra.mxu0 0.0
    %198 = vmatprep.subr.mxu0 0.0
    %199 = vmatpush1.msra.mxu0 0.0
    %200 = vmatprep.subr.mxu0 0.0
    %201 = vmatpush1.msra.mxu0 0.0
    %202 = vmatprep.subr.mxu0 0.0
    %203 = vmatpush1.msra.mxu0 0.0
    %204 = vmatprep.subr.mxu0 0.0
    %205 = vmatpush1.msra.mxu0 0.0
    %206 = vmatprep.subr.mxu0 0.0
    %207 = vmatpush1.msra.mxu0 0.0
    %208 = vmatprep.subr.mxu0 0.0
    %209 = vmatpush1.msra.mxu0 0.0
    %210 = vmatprep.subr.mxu0 0.0
    %211 = vmatpush1.msra.mxu0 0.0
    %212 = vmatprep.subr.mxu0 0.0
    %213 = vmatpush1.msra.mxu0 0.0
    %214 = vmatprep.subr.mxu0 0.0
    %215 = vmatpush1.msra.mxu0 0.0
    %216 = vmatprep.subr.mxu0 0.0
    %217 = vmatpush1.msra.mxu0 0.0
    %218 = vmatprep.subr.mxu0 0.0
    %219 = vmatpush1.msra.mxu0 0.0
    %220 = vmatprep.subr.mxu0 0.0
    %221 = vmatpush1.msra.mxu0 0.0
    %222 = vmatprep.subr.mxu0 0.0
    %223 = vmatpush1.msra.mxu0 0.0
    %224 = vmatprep.subr.mxu0 0.0
    %225 = vmatpush1.msra.mxu0 0.0
    %226 = vmatprep.mubr.f32.mxu0 0.0
    %227 = vmatmul.mubr.f32.gmra.mrb[0].mxu0 %v138
    %v228 = vpop.f32.mrb[0].mxu0
    %v229 = vadd.f32 %v161, %v228
    %v230 = vpop.f32.mrb[0].mxu0
    %231 = vdwg.mxu0
    %v232 = vmul.f32 %v229, 0.5
    %v233 = vtanh.pop %v232
    %v234 = vadd.f32 %v233, 1.0
    %v235 = vmul.f32 %v234, 0.5
    %v236 = vmul.f32 %v229, %v235
    %s237 = scalar_lea.vmem [#allocation5], 128
    %v238 = vld [vmem:[%s237] sm:$0xff]
    %v239 = vld [vmem:[%s237 + $0x8] sm:$0xff]
    %v240 = vld [vmem:[%s237 + $0x10] sm:$0xff]
    %v241 = vld [vmem:[%s237 + $0x18] sm:$0xff]
    %v242 = vld [vmem:[%s237 + $0x20] sm:$0xff]
    %v243 = vld [vmem:[%s237 + $0x28] sm:$0xff]
    %v244 = vld [vmem:[%s237 + $0x30] sm:$0xff]
    %v245 = vld [vmem:[%s237 + $0x38] sm:$0xff]
    %v246 = vld [vmem:[%s237 + $0x40] sm:$0xff]
    %v247 = vld [vmem:[%s237 + $0x48] sm:$0xff]
    %v248 = vld [vmem:[%s237 + $0x50] sm:$0xff]
    %v249 = vld [vmem:[%s237 + $0x58] sm:$0xff]
    %v250 = vld [vmem:[%s237 + $0x60] sm:$0xff]
    %v251 = vld [vmem:[%s237 + $0x68] sm:$0xff]
    %v252 = vld [vmem:[%s237 + $0x70] sm:$0xff]
    %v253 = vld [vmem:[%s237 + $0x78] sm:$0xff]
    %v254 = vld [vmem:[%s3 + $0x1] sm:$0x1]
    %v255 = vlaneseq
    %v256 = vshrl.u32 %v255, 7
    %v257 = vsub.s32 0, %v256
    %v258 = vrot.slane %v254, %v257
    %259 = vmatprep.subr.mxu0 0.0
    %260 = vmatpush1.msra.mxu0 %v238
    %261 = vmatprep.subr.mxu0 0.0
    %262 = vmatpush1.msra.mxu0 %v239
    %263 = vmatprep.subr.mxu0 0.0
    %264 = vmatpush1.msra.mxu0 %v240
    %265 = vmatprep.subr.mxu0 0.0
    %266 = vmatpush1.msra.mxu0 %v241
    %267 = vmatprep.subr.mxu0 0.0
    %268 = vmatpush1.msra.mxu0 %v242
    %269 = vmatprep.subr.mxu0 0.0
    %270 = vmatpush1.msra.mxu0 %v243
    %271 = vmatprep.subr.mxu0 0.0
    %272 = vmatpush1.msra.mxu0 %v244
    %273 = vmatprep.subr.mxu0 0.0
    %274 = vmatpush1.msra.mxu0 %v245
    %275 = vmatprep.subr.mxu0 0.0
    %276 = vmatpush1.msra.mxu0 %v246
    %277 = vmatprep.subr.mxu0 0.0
    %278 = vmatpush1.msra.mxu0 %v247
    %279 = vmatprep.subr.mxu0 0.0
    %280 = vmatpush1.msra.mxu0 %v248
    %281 = vmatprep.subr.mxu0 0.0
    %282 = vmatpush1.msra.mxu0 %v249
    %283 = vmatprep.subr.mxu0 0.0
    %284 = vmatpush1.msra.mxu0 %v250
    %285 = vmatprep.subr.mxu0 0.0
    %286 = vmatpush1.msra.mxu0 %v251
    %287 = vmatprep.subr.mxu0 0.0
    %288 = vmatpush1.msra.mxu0 %v252
    %289 = vmatprep.subr.mxu0 0.0
    %290 = vmatpush1.msra.mxu0 %v253
    %291 = vmatprep.subr.mxu0 0.0
    %292 = vmatpush1.msra.mxu0 0.0
    %293 = vmatprep.subr.mxu0 0.0
    %294 = vmatpush1.msra.mxu0 0.0
    %295 = vmatprep.subr.mxu0 0.0
    %296 = vmatpush1.msra.mxu0 0.0
    %297 = vmatprep.subr.mxu0 0.0
    %298 = vmatpush1.msra.mxu0 0.0
    %299 = vmatprep.subr.mxu0 0.0
    %300 = vmatpush1.msra.mxu0 0.0
    %301 = vmatprep.subr.mxu0 0.0
    %302 = vmatpush1.msra.mxu0 0.0
    %303 = vmatprep.subr.mxu0 0.0
    %304 = vmatpush1.msra.mxu0 0.0
    %305 = vmatprep.subr.mxu0 0.0
    %306 = vmatpush1.msra.mxu0 0.0
    %307 = vmatprep.subr.mxu0 0.0
    %308 = vmatpush1.msra.mxu0 0.0
    %309 = vmatprep.subr.mxu0 0.0
    %310 = vmatpush1.msra.mxu0 0.0
    %311 = vmatprep.subr.mxu0 0.0
    %312 = vmatpush1.msra.mxu0 0.0
    %313 = vmatprep.subr.mxu0 0.0
    %314 = vmatpush1.msra.mxu0 0.0
    %315 = vmatprep.subr.mxu0 0.0
    %316 = vmatpush1.msra.mxu0 0.0
    %317 = vmatprep.subr.mxu0 0.0
    %318 = vmatpush1.msra.mxu0 0.0
    %319 = vmatprep.subr.mxu0 0.0
    %320 = vmatpush1.msra.mxu0 0.0
    %321 = vmatprep.subr.mxu0 0.0
    %322 = vmatpush1.msra.mxu0 0.0
    %323 = vmatprep.mubr.f32.mxu0 0.0
    %324 = vmatmul.mubr.f32.gmra.mrb[0].mxu0 %v236
    %v325 = vpop.f32.mrb[0].mxu0
    %v326 = vadd.f32 %v258, %v325
    %v327 = vpop.f32.mrb[0].mxu0
    %328 = vdwg.mxu0
    %v329 = vmul.f32 %v326, 0.5
    %v330 = vtanh.pop %v329
    %v331 = vadd.f32 %v330, 1.0
    %v332 = vmul.f32 %v331, 0.5
    %v333 = vmul.f32 %v326, %v332
    %334 = vst [vmem:[#allocation7] sm:$0xff] %v333
    // Predicated region
    $region26: #{tpu_custom_call.1} parent=1 // pred_check
      _
    $region27: #{tpu_custom_call.1} parent=1 // pred_check_branch
      %336 = sbr.rel (0) target = $region29
    $region28: #{tpu_custom_call.1} parent=1 // pred_region
      %s338 = ssub.s32 128, 128
      %339 = vsyncadd [#allocation4], %s338
      %s341 = sshll.u32 [#allocation7], 4
      %s342 = int_to_ptr.vmem [resolvable:$true] %s341
      %344 = dma.vmem_to_hbm [thread:$0]  %s342, 128, %s4, [#allocation4]
    $region29: #{tpu_custom_call.1} parent=1 // pred_fallthru
      _
    // Predicated region
    $region30: #{tpu_custom_call.1} parent=1 // pred_check
      _
    $region31: #{tpu_custom_call.1} parent=1 // pred_check_branch
      %346 = sbr.rel (0) target = $region33
    $region32: #{tpu_custom_call.1} parent=1 // pred_region
      %347 = dma.done [#allocation4], 128
    $region33: #{tpu_custom_call.1} parent=1 // pred_fallthru
      _
    %348 = vsyncpa [#allocation3], 1
    %349 = vsyncpa [#allocation6], 1
    %350 = vsyncpa [#allocation4], 1

</llo_original>
